<compile_context>
chip_gen: v5e
topology: v5e:2x2
jax: 0.10.0
libtpu: 0.0.40
codegen_flags: <defaults>
</compile_context>

<pallas_src>
import functools

import jax
import jax.numpy as jnp
from jax.experimental import pallas as pl
from jax.experimental.pallas import tpu as pltpu

_LANE = 128
_SUBLANE = 8
_TILE_ROWS = 1024        # rows of 128 lanes per grid step (512 KiB in f32)
_NUM_CORE_SPLIT = 2      # leading "parallel" grid axis (v7x megacore)


def _round_up(a, b):
    return (a + b - 1) // b * b


def _dice_kernel(x_ref, t_ref, out_ref, *, tile_rows, n_valid, needs_mask):
    c = pl.program_id(0)
    i = pl.program_id(1)

    @pl.when(i == 0)
    def _():
        out_ref[...] = jnp.zeros_like(out_ref)

    x = x_ref[...].astype(jnp.float32)
    t = t_ref[...].astype(jnp.float32)

    # sigmoid(x) = 0.5 * (tanh(x/2) + 1): single EUP op instead of exp+divide.
    prob = 0.5 * (jnp.tanh(0.5 * x) + 1.0)

    pt = prob * t            # sum -> numerator / 2
    sm = prob + t            # sum -> denominator

    if needs_mask:
        # Mask out elements past the valid length: Pallas pads partial blocks
        # with unspecified data, and the second "core" may re-read a clamped
        # duplicate block (see in_index_map).  n_valid is static.
        n_full_rows = n_valid // _LANE
        n_rem = n_valid % _LANE
        blk = c * pl.num_programs(1) + i        # logical (unclamped) block id
        grow = blk * tile_rows + jax.lax.broadcasted_iota(
            jnp.int32, (tile_rows, _LANE), 0)
        lane = jax.lax.broadcasted_iota(jnp.int32, (tile_rows, _LANE), 1)
        valid = (grow < n_full_rows) | ((grow == n_full_rows) & (lane < n_rem))
        pt = jnp.where(valid, pt, 0.0)
        sm = jnp.where(valid, sm, 0.0)

    # Fold as (tile_rows//8, 8, 128) and reduce the leading axis: pure vreg
    # adds (VPU) into the VMEM-resident (8,128) accumulators.
    pt8 = jnp.sum(pt.reshape(-1, _SUBLANE, _LANE), axis=0)
    sm8 = jnp.sum(sm.reshape(-1, _SUBLANE, _LANE), axis=0)
    out_ref[0, 0, :, :] = out_ref[0, 0, :, :] + pt8
    out_ref[0, 1, :, :] = out_ref[0, 1, :, :] + sm8


def dice_loss(inputs, target):
    """Pallas equivalent of DiceLoss.forward(input, target)."""
    x = jnp.reshape(inputs, (-1,))
    t = jnp.reshape(target, (-1,))
    n = x.shape[0]

    # Lane padding only if the flat length is not a multiple of 128 (rare for
    # NCHW tensors); padded elements are masked out in-kernel anyway.
    lane_pad = (-n) % _LANE
    if lane_pad:
        x = jnp.pad(x, (0, lane_pad))
        t = jnp.pad(t, (0, lane_pad))
    rows = (n + lane_pad) // _LANE

    if rows >= _TILE_ROWS:
        tile_rows = _TILE_ROWS
    else:
        # Tiny input: a single block spanning all rows (rounded to sublanes).
        tile_rows = _round_up(rows, _SUBLANE)
        row_pad = tile_rows - rows
        if row_pad:
            x = jnp.pad(x, (0, row_pad * _LANE))
            t = jnp.pad(t, (0, row_pad * _LANE))
        rows = tile_rows

    x2 = x.reshape(rows, _LANE)
    t2 = t.reshape(rows, _LANE)

    n_row_blocks = (rows + tile_rows - 1) // tile_rows
    steps = (n_row_blocks + _NUM_CORE_SPLIT - 1) // _NUM_CORE_SPLIT
    needs_mask = (_NUM_CORE_SPLIT * steps * tile_rows * _LANE) != n

    def in_index_map(c, i):
        # Clamp so overhang steps of the last core re-read an in-bounds block;
        # their contribution is zeroed by the in-kernel mask.
        return (jnp.minimum(c * steps + i, n_row_blocks - 1), 0)

    kernel = functools.partial(
        _dice_kernel, tile_rows=tile_rows, n_valid=n, needs_mask=needs_mask)

    partials = pl.pallas_call(
        kernel,
        out_shape=jax.ShapeDtypeStruct(
            (_NUM_CORE_SPLIT, 2, _SUBLANE, _LANE), jnp.float32),
        grid_spec=pltpu.PrefetchScalarGridSpec(
            num_scalar_prefetch=0,
            grid=(_NUM_CORE_SPLIT, steps),
            in_specs=[
                pl.BlockSpec((tile_rows, _LANE), in_index_map),
                pl.BlockSpec((tile_rows, _LANE), in_index_map),
            ],
            out_specs=pl.BlockSpec(
                (1, 2, _SUBLANE, _LANE), lambda c, i: (c, 0, 0, 0)),
        ),
        compiler_params=pltpu.CompilerParams(
            dimension_semantics=("parallel", "arbitrary")),
    )(x2, t2)

    pt_total = jnp.sum(partials[:, 0])     # sum(prob * target)
    den_total = jnp.sum(partials[:, 1])    # sum(prob) + sum(target)
    return 1.0 - (2.0 * pt_total + 1.0) / (den_total + 1.0)


def _reference_dice_loss(inputs, target):
    prob = jax.nn.sigmoid(inputs.astype(jnp.float32))
    tgt = target.astype(jnp.float32)
    numerator = 2.0 * jnp.sum(prob * tgt)
    denominator = jnp.sum(prob) + jnp.sum(tgt)
    return 1.0 - (numerator + 1.0) / (denominator + 1.0)


if __name__ == "__main__":
    key = jax.random.PRNGKey(0)
    k1, k2, k3, k4 = jax.random.split(key, 4)

    # Small NCHW-shaped logits + binary targets, like the PyTorch module sees.
    x = jax.random.normal(k1, (2, 4, 16, 16), dtype=jnp.float32)
    tgt = (jax.random.uniform(k2, (2, 4, 16, 16)) > 0.5).astype(jnp.float32)
    loss = jax.block_until_ready(dice_loss(x, tgt))
    ref = jax.block_until_ready(_reference_dice_loss(x, tgt))
    assert jnp.allclose(loss, ref, atol=1e-5, rtol=1e-5), (loss, ref)

    # Medium case exercising multi-block accumulation, the 2-way core split,
    # block clamping and the ragged-tail mask.
    xb = jax.random.normal(k3, (4, 4, 224, 224), dtype=jnp.float32)
    tb = (jax.random.uniform(k4, (4, 4, 224, 224)) > 0.5).astype(jnp.float32)
    loss_b = jax.block_until_ready(dice_loss(xb, tb))
    ref_b = jax.block_until_ready(_reference_dice_loss(xb, tb))
    assert jnp.allclose(loss_b, ref_b, atol=1e-5, rtol=1e-5), (loss_b, ref_b)

    print("KERNEL_OK")
</pallas_src>

<mosaic_0001>
module attributes {stable_mosaic.version = 11 : i64} {
  func.func @_dice_kernel(%arg0: i32, %arg1: i32, %arg2: memref<16x128xf32, #tpu.memory_space<vmem>>, %arg3: memref<16x128xf32, #tpu.memory_space<vmem>>, %arg4: memref<1x2x8x128xf32, #tpu.memory_space<vmem>>) attributes {dimension_semantics = [#tpu.dimension_semantics<parallel>, #tpu.dimension_semantics<arbitrary>], iteration_bounds = array<i64: 2, 1>, scalar_prefetch = 0 : i64, scratch_operands = 0 : i64, tpu.core_type = #tpu.core_type<tc>, window_params = [{transform_indices = @transform_0, window_bounds = array<i64: 16, 128>}, {transform_indices = @transform_1, window_bounds = array<i64: 16, 128>}, {transform_indices = @transform_2, window_bounds = array<i64: 1, 2, 8, 128>}]} {
    %c0_i32 = arith.constant 0 : i32
    %0 = arith.cmpi eq, %arg1, %c0_i32 : i32
    %1 = arith.extui %0 : i1 to i32
    %c0_i32_0 = arith.constant 0 : i32
    %2 = arith.cmpi ne, %1, %c0_i32_0 : i32
    scf.if %2 {
      %cst_28 = arith.constant 0.000000e+00 : f32
      %49 = vector.broadcast %cst_28 : f32 to vector<1x2x8x128xf32>
      %c0_29 = arith.constant 0 : index
      %c0_30 = arith.constant 0 : index
      %c0_31 = arith.constant 0 : index
      %c0_32 = arith.constant 0 : index
      %50 = vector.load %arg4[%c0_29, %c0_30, %c0_31, %c0_32] : memref<1x2x8x128xf32, #tpu.memory_space<vmem>>, vector<1x2x8x128xf32>
      tpu.vector_store %arg4[%c0_29, %c0_30, %c0_31, %c0_32], %49 {strides = array<i32>} : memref<1x2x8x128xf32, #tpu.memory_space<vmem>>, vector<1x2x8x128xf32>,
    } else {
    }
    %c0 = arith.constant 0 : index
    %c0_1 = arith.constant 0 : index
    %3 = vector.load %arg2[%c0, %c0_1] : memref<16x128xf32, #tpu.memory_space<vmem>>, vector<16x128xf32>
    %c0_2 = arith.constant 0 : index
    %c0_3 = arith.constant 0 : index
    %4 = vector.load %arg3[%c0_2, %c0_3] : memref<16x128xf32, #tpu.memory_space<vmem>>, vector<16x128xf32>
    %cst = arith.constant 5.000000e-01 : f32
    %5 = vector.broadcast %cst : f32 to vector<16x128xf32>
    %6 = arith.mulf %5, %3 : vector<16x128xf32>
    %7 = math.tanh %6 : vector<16x128xf32>
    %cst_4 = arith.constant 1.000000e+00 : f32
    %8 = vector.broadcast %cst_4 : f32 to vector<16x128xf32>
    %9 = arith.addf %7, %8 : vector<16x128xf32>
    %cst_5 = arith.constant 5.000000e-01 : f32
    %10 = vector.broadcast %cst_5 : f32 to vector<16x128xf32>
    %11 = arith.mulf %10, %9 : vector<16x128xf32>
    %12 = arith.mulf %11, %4 : vector<16x128xf32>
    %13 = arith.addf %11, %4 : vector<16x128xf32>
    %c1_i32 = arith.constant 1 : i32
    %14 = arith.muli %arg0, %c1_i32 : i32
    %15 = arith.addi %14, %arg1 : i32
    %c16_i32 = arith.constant 16 : i32
    %16 = arith.muli %15, %c16_i32 : i32
    %17 = tpu.iota {dimensions = array<i32: 0>} : vector<16x128xi32>
    %18 = vector.broadcast %16 : i32 to vector<16x128xi32>
    %19 = arith.addi %18, %17 : vector<16x128xi32>
    %20 = tpu.iota {dimensions = array<i32: 1>} : vector<16x128xi32>
    %c16_i32_6 = arith.constant 16 : i32
    %21 = vector.broadcast %c16_i32_6 : i32 to vector<16x128xi32>
    %22 = arith.cmpi slt, %19, %21 : vector<16x128xi32>
    %c16_i32_7 = arith.constant 16 : i32
    %23 = vector.broadcast %c16_i32_7 : i32 to vector<16x128xi32>
    %24 = arith.cmpi eq, %19, %23 : vector<16x128xi32>
    %c0_i32_8 = arith.constant 0 : i32
    %25 = vector.broadcast %c0_i32_8 : i32 to vector<16x128xi32>
    %26 = arith.cmpi slt, %20, %25 : vector<16x128xi32>
    %27 = arith.andi %24, %26 : vector<16x128xi1>
    %28 = arith.ori %22, %27 : vector<16x128xi1>
    %cst_9 = arith.constant 0.000000e+00 : f32
    %29 = vector.broadcast %cst_9 : f32 to vector<16x128xf32>
    %30 = arith.select %28, %12, %29 : vector<16x128xi1>, vector<16x128xf32>
    %cst_10 = arith.constant 0.000000e+00 : f32
    %31 = vector.broadcast %cst_10 : f32 to vector<16x128xf32>
    %32 = arith.select %28, %13, %31 : vector<16x128xi1>, vector<16x128xf32>
    %33 = vector.shape_cast %30 : vector<16x128xf32> to vector<2x8x128xf32>
    %cst_11 = arith.constant dense<0.000000e+00> : vector<8x128xf32>
    %34 = vector.multi_reduction <add>, %33, %cst_11 [0] : vector<2x8x128xf32> to vector<8x128xf32>
    %35 = vector.shape_cast %32 : vector<16x128xf32> to vector<2x8x128xf32>
    %cst_12 = arith.constant dense<0.000000e+00> : vector<8x128xf32>
    %36 = vector.multi_reduction <add>, %35, %cst_12 [0] : vector<2x8x128xf32> to vector<8x128xf32>
    %c0_13 = arith.constant 0 : index
    %c0_14 = arith.constant 0 : index
    %c0_15 = arith.constant 0 : index
    %c0_16 = arith.constant 0 : index
    %37 = vector.load %arg4[%c0_13, %c0_14, %c0_15, %c0_16] : memref<1x2x8x128xf32, #tpu.memory_space<vmem>>, vector<1x1x8x128xf32>
    %38 = vector.shape_cast %37 : vector<1x1x8x128xf32> to vector<8x128xf32>
    %39 = arith.addf %38, %34 : vector<8x128xf32>
    %c0_17 = arith.constant 0 : index
    %c0_18 = arith.constant 0 : index
    %c0_19 = arith.constant 0 : index
    %c0_20 = arith.constant 0 : index
    %40 = vector.load %arg4[%c0_17, %c0_18, %c0_19, %c0_20] : memref<1x2x8x128xf32, #tpu.memory_space<vmem>>, vector<1x1x8x128xf32>
    %41 = vector.shape_cast %40 : vector<1x1x8x128xf32> to vector<8x128xf32>
    %42 = vector.shape_cast %39 : vector<8x128xf32> to vector<1x1x8x128xf32>
    tpu.vector_store %arg4[%c0_17, %c0_18, %c0_19, %c0_20], %42 {strides = array<i32>} : memref<1x2x8x128xf32, #tpu.memory_space<vmem>>, vector<1x1x8x128xf32>,
    %c0_21 = arith.constant 0 : index
    %c1 = arith.constant 1 : index
    %c0_22 = arith.constant 0 : index
    %c0_23 = arith.constant 0 : index
    %43 = vector.load %arg4[%c0_21, %c1, %c0_22, %c0_23] : memref<1x2x8x128xf32, #tpu.memory_space<vmem>>, vector<1x1x8x128xf32>
    %44 = vector.shape_cast %43 : vector<1x1x8x128xf32> to vector<8x128xf32>
    %45 = arith.addf %44, %36 : vector<8x128xf32>
    %c0_24 = arith.constant 0 : index
    %c1_25 = arith.constant 1 : index
    %c0_26 = arith.constant 0 : index
    %c0_27 = arith.constant 0 : index
    %46 = vector.load %arg4[%c0_24, %c1_25, %c0_26, %c0_27] : memref<1x2x8x128xf32, #tpu.memory_space<vmem>>, vector<1x1x8x128xf32>
    %47 = vector.shape_cast %46 : vector<1x1x8x128xf32> to vector<8x128xf32>
    %48 = vector.shape_cast %45 : vector<8x128xf32> to vector<1x1x8x128xf32>
    tpu.vector_store %arg4[%c0_24, %c1_25, %c0_26, %c0_27], %48 {strides = array<i32>} : memref<1x2x8x128xf32, #tpu.memory_space<vmem>>, vector<1x1x8x128xf32>,
    return
  }
  func.func @transform_0(%arg0: i32, %arg1: i32) -> (i32, i32) {
    %c1_i32 = arith.constant 1 : i32
    %0 = arith.muli %arg0, %c1_i32 : i32
    %1 = arith.addi %0, %arg1 : i32
    %c0_i32 = arith.constant 0 : i32
    %2 = arith.minsi %1, %c0_i32 : i32
    %c0_i32_0 = arith.constant 0 : i32
    %c0_i32_1 = arith.constant 0 : i32
    return %2, %c0_i32_0 : i32, i32
  }
  func.func @transform_1(%arg0: i32, %arg1: i32) -> (i32, i32) {
    %c1_i32 = arith.constant 1 : i32
    %0 = arith.muli %arg0, %c1_i32 : i32
    %1 = arith.addi %0, %arg1 : i32
    %c0_i32 = arith.constant 0 : i32
    %2 = arith.minsi %1, %c0_i32 : i32
    %c0_i32_0 = arith.constant 0 : i32
    %c0_i32_1 = arith.constant 0 : i32
    return %2, %c0_i32_0 : i32, i32
  }
  func.func @transform_2(%arg0: i32, %arg1: i32) -> (i32, i32, i32, i32) {
    %c0_i32 = arith.constant 0 : i32
    %c0_i32_0 = arith.constant 0 : i32
    %c0_i32_1 = arith.constant 0 : i32
    %c0_i32_2 = arith.constant 0 : i32
    return %arg0, %c0_i32, %c0_i32_0, %c0_i32_1 : i32, i32, i32, i32
  }
}

</mosaic_0001>

<llo_original>
// kernel: tpu_custom_call.1
$region0: #{tpu_custom_call.1}
  #allocation0 [shape = 'u32[]', space=smem, size = 0x4, offset = 0x4, fixed_abs, tag = 'smem constant byte address 0x4 - core index']
  #allocation1 [shape = 'u32[72,128]{1,0:T(1,128)}', space=vmem, size = 0x9000, scoped, tag = 'internal scratch']
  %s0 = inlined_call_operand.hbm [shape: f32[16,128], index: 0, kind: input, shape index: {}]
  %s1 = inlined_call_operand.hbm [shape: f32[16,128], index: 1, kind: input, shape index: {}]
  %s2 = inlined_call_operand.hbm [shape: f32[2,2,8,128], index: 2, kind: output, shape index: {}]
  %s3 = sld [smem:[#allocation0]]
  $region53: #{tpu_custom_call.1} parent=0
    _
  %s5 = ssub.s32 1, %s3
  %s6 = scalar_select 0, %s5, %s3
  $region1: #{tpu_custom_call.1} parent=0
    #allocation2 [shape = 'u8[16384]{0}', space=vmem, size = 0x4000, scoped, tag = 'input window, operand 0']
    #allocation3 [shape = 's32[2]{0}', space=sflag, size = 0x8, scoped, tag = 'scoped memory for tpu_custom_call.1']
    #allocation4 [shape = 's32[2]{0}', space=sflag, size = 0x8, scoped, tag = 'scoped memory for tpu_custom_call.1']
    #allocation5 [shape = 'u8[16384]{0}', space=vmem, size = 0x4000, scoped, tag = 'input window, operand 1']
    #allocation6 [shape = 's32[2]{0}', space=sflag, size = 0x8, scoped, tag = 'scoped memory for tpu_custom_call.1']
    #allocation7 [shape = 'u8[16384]{0}', space=vmem, size = 0x4000, scoped, tag = 'output window, operand 0']
    %7 = vsyncpa [#allocation3], 0
    %s8 = scalar_lea.sflag [#allocation3], 1
    %9 = vsyncpa %s8, 0
    %10 = vsyncpa [#allocation6], 0
    %s11 = scalar_lea.sflag [#allocation6], 1
    %12 = vsyncpa %s11, 0
    %13 = vsyncpa [#allocation4], 0
    %s14 = scalar_lea.sflag [#allocation4], 1
    %15 = vsyncpa %s14, 0
    loop: start=0, step=1, limit=4
    $region2: #{tpu_custom_call.1} parent=1 // loop_pre_header
      _
    $region3: #{tpu_custom_call.1} parent=1 // loop_header
      %s17 = sphi 0, %s21
      %p18 = scmp.ge.s32.totalorder %s17, 4
      %s24 = sphi 0, %s36
      %s25 = sphi 0, %s32
      %s26 = sphi 0, %s24
      %s27 = sphi 0, %s25
      %s28 = sphi 0, %s26
      %s29 = sphi 0, %s27
      %s45 = sphi 0, %s47
      %s48 = sphi 0, %s45
      %s49 = sphi 0, %s48
      %s65 = sphi 0, %s49
      %s77 = sphi 0, %s79
      %s80 = sphi 0, %s77
      %s81 = sphi 0, %s80
      %s97 = sphi 0, %s81
      %s103 = sphi 0, %s105
      %s106 = sphi 0, %s103
      %s107 = sphi 0, %s106
      %s123 = sphi 0, %s107
    $region4: #{tpu_custom_call.1} parent=1 // loop_header_branch
      %20 = sbr.rel (%p18) target = $region8
    $region5: #{tpu_custom_call.1} parent=1 // loop_body
      %s22 = ssub.s32 %s17, 1
      %s23 = ssub.s32 %s17, 2
      %s30 = sadd.s32 1, %s25
      %p31 = scmp.ge.s32.totalorder %s30, 1
      %s32 = scalar_select %p31, 0, %s30
      %s33 = sadd.s32 1, %s24
      %s34 = scalar_select %p31, %s33, %s24
      %p35 = scmp.ge.s32.totalorder %s34, 2
      %s36 = scalar_select %p35, 0, %s34
      %s37 = sadd.s32 %s24, %s25
      %p38 = scmp.lt.s32.totalorder %s37, 0
      %s39 = scalar_select %p38, %s37, 0
      %s40 = sadd.s32 %s36, %s32
      %p41 = scmp.lt.s32.totalorder %s40, 0
      %s42 = scalar_select %p41, %s40, 0
      %s43 = ssub.s32 %s39, %s42
      %p44 = scmp.eq.s32.totalorder %s43, 0
      %s46 = sadd.s32 %s45, 1
      %s47 = scalar_select %p44, %s45, %s46
      %p50 = pneg %p44
      %p51 = scmp.eq.s32.totalorder %s17, 1
      %p52 = por %p50, %p51
      %p53 = scmp.ne.s32.totalorder %s45, %s48
      %p54 = scmp.eq.s32.totalorder %s17, 0
      %p55 = por %p53, %p54
      %p56 = scmp.ne.s32.totalorder %s45, %s48
      %p57 = scmp.eq.s32.totalorder %s22, 1
      %p58 = por %p56, %p57
      %p59 = scmp.ne.s32.totalorder %s48, %s49
      %p60 = scmp.eq.s32.totalorder %s22, 0
      %p61 = por %p59, %p60
      %p62 = scmp.ne.s32.totalorder %s48, %s49
      %p63 = scmp.eq.s32.totalorder %s23, 1
      %p64 = por %p62, %p63
      %p66 = scmp.ne.s32.totalorder %s49, %s65
      %p67 = scmp.eq.s32.totalorder %s23, 0
      %p68 = por %p66, %p67
      %s69 = sadd.s32 %s24, %s25
      %p70 = scmp.lt.s32.totalorder %s69, 0
      %s71 = scalar_select %p70, %s69, 0
      %s72 = sadd.s32 %s36, %s32
      %p73 = scmp.lt.s32.totalorder %s72, 0
      %s74 = scalar_select %p73, %s72, 0
      %s75 = ssub.s32 %s71, %s74
      %p76 = scmp.eq.s32.totalorder %s75, 0
      %s78 = sadd.s32 %s77, 1
      %s79 = scalar_select %p76, %s77, %s78
      %p82 = pneg %p76
      %p83 = scmp.eq.s32.totalorder %s17, 1
      %p84 = por %p82, %p83
      %p85 = scmp.ne.s32.totalorder %s77, %s80
      %p86 = scmp.eq.s32.totalorder %s17, 0
      %p87 = por %p85, %p86
      %p88 = scmp.ne.s32.totalorder %s77, %s80
      %p89 = scmp.eq.s32.totalorder %s22, 1
      %p90 = por %p88, %p89
      %p91 = scmp.ne.s32.totalorder %s80, %s81
      %p92 = scmp.eq.s32.totalorder %s22, 0
      %p93 = por %p91, %p92
      %p94 = scmp.ne.s32.totalorder %s80, %s81
      %p95 = scmp.eq.s32.totalorder %s23, 1
      %p96 = por %p94, %p95
      %p98 = scmp.ne.s32.totalorder %s81, %s97
      %p99 = scmp.eq.s32.totalorder %s23, 0
      %p100 = por %p98, %p99
      %s101 = ssub.s32 %s24, %s36
      %p102 = scmp.eq.s32.totalorder %s101, 0
      %s104 = sadd.s32 %s103, 1
      %s105 = scalar_select %p102, %s103, %s104
      %p108 = pneg %p102
      %p109 = scmp.eq.s32.totalorder %s17, 1
      %p110 = por %p108, %p109
      %p111 = scmp.ne.s32.totalorder %s103, %s106
      %p112 = scmp.eq.s32.totalorder %s17, 0
      %p113 = por %p111, %p112
      %p114 = scmp.ne.s32.totalorder %s103, %s106
      %p115 = scmp.eq.s32.totalorder %s22, 1
      %p116 = por %p114, %p115
      %p117 = scmp.ne.s32.totalorder %s106, %s107
      %p118 = scmp.eq.s32.totalorder %s22, 0
      %p119 = por %p117, %p118
      %p120 = scmp.ne.s32.totalorder %s106, %s107
      %p121 = scmp.eq.s32.totalorder %s23, 1
      %p122 = por %p120, %p121
      %p124 = scmp.ne.s32.totalorder %s107, %s123
      %p125 = scmp.eq.s32.totalorder %s23, 0
      %p126 = por %p124, %p125
      %p127 = scmp.le.s32.totalorder 1, %s17
      %p128 = scmp.lt.s32.totalorder %s17, 3
      %p129 = pnand %p127, %p128
      %p130 = pneg %p129
      // Predicated region
      $region9: #{tpu_custom_call.1} parent=5 // pred_check
        _
      $region10: #{tpu_custom_call.1} parent=5 // pred_check_branch
        %132 = sbr.rel (%p129) target = $region12
      $region11: #{tpu_custom_call.1} parent=5 // pred_region
        %s133 = ssub.s32 %s17, 1
      $region12: #{tpu_custom_call.1} parent=5 // pred_fallthru
        _
      %p134 = scmp.lt.s32.totalorder %s17, 2
      // Predicated region
      $region13: #{tpu_custom_call.1} parent=5 // pred_check
        %p135 = pneg %p134
      $region14: #{tpu_custom_call.1} parent=5 // pred_check_branch
        %137 = sbr.rel (%p135) target = $region16
      $region15: #{tpu_custom_call.1} parent=5 // pred_region
        // Predicated region
        $region17: #{tpu_custom_call.1} parent=15 // pred_check
          %p138 = pneg %p55
        $region18: #{tpu_custom_call.1} parent=15 // pred_check_branch
          %140 = sbr.rel (%p138) target = $region20
        $region19: #{tpu_custom_call.1} parent=15 // pred_region
          %s141 = sand.u32 %s45, 1
          %s142 = scalar_lea.sflag [#allocation3], %s141
          %s143 = sand.u32 %s45, 1
          %s144 = smul.addr %s143, 16
          %s145 = scalar_lea.vmem [#allocation2], %s144
          %s146 = sadd.s32 %s24, %s25
          %p147 = scmp.lt.s32.totalorder %s146, 0
          %s148 = scalar_select %p147, %s146, 0
          %s149 = smul.u32 2, %s148
          %151 = vsyncadd %s142, 0
          %s152 = smul.addr %s149, 8
          %s153 = scalar_lea.hbm %s0, %s152
          %s154 = sshll.u32 %s153, 4
          %s155 = int_to_ptr.hbm [resolvable:$true] %s154
          %s156 = sshll.u32 %s145, 4
          %s157 = int_to_ptr.vmem [resolvable:$true] %s156
          %162 = dma.hbm_to_vmem [thread:$0]  %s155, 256, %s157, %s142, 128, 128, 8
        $region20: #{tpu_custom_call.1} parent=15 // pred_fallthru
          _
        // Predicated region
        $region21: #{tpu_custom_call.1} parent=15 // pred_check
          %p163 = pneg %p87
        $region22: #{tpu_custom_call.1} parent=15 // pred_check_branch
          %165 = sbr.rel (%p163) target = $region24
        $region23: #{tpu_custom_call.1} parent=15 // pred_region
          %s166 = sand.u32 %s77, 1
          %s167 = scalar_lea.sflag [#allocation6], %s166
          %s168 = sand.u32 %s77, 1
          %s169 = smul.addr %s168, 16
          %s170 = scalar_lea.vmem [#allocation5], %s169
          %s171 = sadd.s32 %s24, %s25
          %p172 = scmp.lt.s32.totalorder %s171, 0
          %s173 = scalar_select %p172, %s171, 0
          %s174 = smul.u32 2, %s173
          %176 = vsyncadd %s167, 0
          %s177 = smul.addr %s174, 8
          %s178 = scalar_lea.hbm %s1, %s177
          %s179 = sshll.u32 %s178, 4
          %s180 = int_to_ptr.hbm [resolvable:$true] %s179
          %s181 = sshll.u32 %s170, 4
          %s182 = int_to_ptr.vmem [resolvable:$true] %s181
          %187 = dma.hbm_to_vmem [thread:$0]  %s180, 256, %s182, %s167, 128, 128, 8
        $region24: #{tpu_custom_call.1} parent=15 // pred_fallthru
          _
      $region16: #{tpu_custom_call.1} parent=5 // pred_fallthru
        _
      %p188 = scmp.le.s32.totalorder 1, %s17
      %p189 = scmp.lt.s32.totalorder %s17, 3
      %p190 = pnand %p188, %p189
      %p191 = pneg %p190
      // Predicated region
      $region25: #{tpu_custom_call.1} parent=5 // pred_check
        _
      $region26: #{tpu_custom_call.1} parent=5 // pred_check_branch
        %193 = sbr.rel (%p190) target = $region28
      $region27: #{tpu_custom_call.1} parent=5 // pred_region
        %s194 = ssub.s32 %s17, 1
        %s195 = sand.u32 %s48, 1
        %s196 = scalar_lea.sflag [#allocation3], %s195
        %s197 = sand.u32 %s48, 1
        %s198 = smul.addr %s197, 16
        %s199 = scalar_lea.vmem [#allocation2], %s198
        // Predicated region
        $region29: #{tpu_custom_call.1} parent=27 // pred_check
          %p200 = pneg %p61
        $region30: #{tpu_custom_call.1} parent=27 // pred_check_branch
          %202 = sbr.rel (%p200) target = $region32
        $region31: #{tpu_custom_call.1} parent=27 // pred_region
          %204 = dma.done %s196, 256
        $region32: #{tpu_custom_call.1} parent=27 // pred_fallthru
          _
        %s205 = sand.u32 %s80, 1
        %s206 = scalar_lea.sflag [#allocation6], %s205
        %s207 = sand.u32 %s80, 1
        %s208 = smul.addr %s207, 16
        %s209 = scalar_lea.vmem [#allocation5], %s208
        // Predicated region
        $region33: #{tpu_custom_call.1} parent=27 // pred_check
          %p210 = pneg %p93
        $region34: #{tpu_custom_call.1} parent=27 // pred_check_branch
          %212 = sbr.rel (%p210) target = $region36
        $region35: #{tpu_custom_call.1} parent=27 // pred_region
          %214 = dma.done %s206, 256
        $region36: #{tpu_custom_call.1} parent=27 // pred_fallthru
          _
        %s215 = sand.u32 %s48, 1
        %s216 = scalar_lea.sflag [#allocation3], %s215
        %s217 = sand.u32 %s48, 1
        %s218 = smul.addr %s217, 16
        %s219 = scalar_lea.vmem [#allocation2], %s218
        %p220 = pneg %p61
        %p221 = pneg %p58
        %s222 = sand.u32 %s80, 1
        %s223 = scalar_lea.sflag [#allocation6], %s222
        %s224 = sand.u32 %s80, 1
        %s225 = smul.addr %s224, 16
        %s226 = scalar_lea.vmem [#allocation5], %s225
        %p227 = pneg %p93
        %p228 = pneg %p90
        %p229 = pneg %p119
        %p230 = pneg %p116
        %s231 = sand.u32 %s106, 1
        %s232 = scalar_lea.sflag [#allocation4], %s231
        %s233 = sand.u32 %s106, 1
        %s234 = smul.addr %s233, 16
        %s235 = scalar_lea.vmem [#allocation7], %s234
        %s236 = sadd.s32 %s26, %s27
        %p237 = scmp.lt.s32.totalorder %s236, 0
        %s238 = scalar_select %p237, %s236, 0
        %s239 = smul.u32 2, %s238
        %s240 = sadd.s32 %s26, %s27
        %p241 = scmp.lt.s32.totalorder %s240, 0
        %s242 = scalar_select %p241, %s240, 0
        %s243 = smul.u32 2, %s242
        %p244 = scmp.eq.s32.totalorder %s27, 0
        // Predicated region
        $region37: #{tpu_custom_call.1} parent=27 // pred_check
          %p245 = pneg %p244
        $region38: #{tpu_custom_call.1} parent=27 // pred_check_branch
          %247 = sbr.rel (%p245) target = $region40
        $region39: #{tpu_custom_call.1} parent=27 // pred_region
          %248 = vst [vmem:[%s235] sm:$0xff] 0.0
          %249 = vst [vmem:[%s235 + $0x8] sm:$0xff] 0.0
        $region40: #{tpu_custom_call.1} parent=27 // pred_fallthru
          _
        %v250 = vld [vmem:[%s199] sm:$0xff]
        %v251 = vld [vmem:[%s199 + $0x8] sm:$0xff]
        %v252 = vld [vmem:[%s209] sm:$0xff]
        %v253 = vld [vmem:[%s209 + $0x8] sm:$0xff]
        %v254 = vmul.f32 %v250, 0.5
        %v255 = vmul.f32 %v251, 0.5
        %v256 = vtanh.pop %v254
        %v257 = vtanh.pop %v255
        %v258 = vadd.f32 %v256, 1.0
        %v259 = vadd.f32 %v257, 1.0
        %v260 = vmul.f32 %v258, 0.5
        %v261 = vmul.f32 %v259, 0.5
        %v262 = vmul.f32 %v260, %v252
        %v263 = vmul.f32 %v261, %v253
        %v264 = vadd.f32 %v260, %v252
        %v265 = vadd.f32 %v261, %v253
        %s266 = sadd.s32 %s26, %s27
        %s267 = smul.u32 %s266, 16
        %v268 = vlaneseq
        %v269 = vshrl.u32 %v268, 7
        %v270 = vadd.s32 %v269, 8
        %v271 = vstv %s267
        %v272 = vadd.s32 %v271, %v269
        %v273 = vadd.s32 %v271, %v270
        %v274 = vlaneseq
        %v275 = vand.u32 %v274, 127
        %vm276 = vcmp.lt.s32.totalorder %v272, 16
        %vm277 = vcmp.lt.s32.totalorder %v273, 16
        %vm278 = vcmp.eq.s32.totalorder %v272, 16
        %vm279 = vcmp.eq.s32.totalorder %v273, 16
        %vm280 = vcmp.lt.s32.totalorder %v275, 0
        %vm281 = vmand %vm278, %vm280
        %vm282 = vmand %vm279, %vm280
        %vm283 = vmor %vm276, %vm281
        %vm284 = vmor %vm277, %vm282
        %v285 = vsel %vm283, %v262, 0.0
        %v286 = vsel %vm284, %v263, 0.0
        %v287 = vsel %vm283, %v264, 0.0
        %v288 = vsel %vm284, %v265, 0.0
        %v289 = vadd.f32 %v285, %v286
        %v290 = vadd.f32 %v287, %v288
        %v291 = vld [vmem:[%s235] sm:$0xff]
        %v292 = vadd.f32 %v291, %v289
        %293 = vst [vmem:[%s235] sm:$0xff] %v292
        %s294 = scalar_lea.vmem %s235, 8 [#allocation7]
        %v295 = vld [vmem:[%s294] sm:$0xff]
        %v296 = vadd.f32 %v295, %v290
        %297 = vst [vmem:[%s294] sm:$0xff] %v296
        %s298 = sand.u32 %s106, 1
        %s299 = scalar_lea.sflag [#allocation4], %s298
        %s300 = sand.u32 %s106, 1
        %s301 = smul.addr %s300, 16
        %s302 = scalar_lea.vmem [#allocation7], %s301
        // Predicated region
        $region41: #{tpu_custom_call.1} parent=27 // pred_check
          %p303 = pneg %p116
        $region42: #{tpu_custom_call.1} parent=27 // pred_check_branch
          %305 = sbr.rel (%p303) target = $region44
        $region43: #{tpu_custom_call.1} parent=27 // pred_region
          %307 = vsyncadd %s299, 0
          %s308 = smul.addr %s26, 2
          %s309 = smul.addr %s308, 8
          %s310 = scalar_lea.hbm %s2, %s309
          %s311 = sshll.u32 %s302, 4
          %s312 = int_to_ptr.vmem [resolvable:$true] %s311
          %s313 = sshll.u32 %s310, 4
          %s314 = int_to_ptr.hbm [resolvable:$true] %s313
          %319 = dma.vmem_to_hbm [thread:$0]  %s312, 256, %s314, %s299, 128, 128, 8
        $region44: #{tpu_custom_call.1} parent=27 // pred_fallthru
          _
      $region28: #{tpu_custom_call.1} parent=5 // pred_fallthru
        _
      %p320 = scmp.le.s32.totalorder 2, %s17
      // Predicated region
      $region45: #{tpu_custom_call.1} parent=5 // pred_check
        %p321 = pneg %p320
      $region46: #{tpu_custom_call.1} parent=5 // pred_check_branch
        %323 = sbr.rel (%p321) target = $region48
      $region47: #{tpu_custom_call.1} parent=5 // pred_region
        %s324 = ssub.s32 %s17, 2
        // Predicated region
        $region49: #{tpu_custom_call.1} parent=47 // pred_check
          %p325 = pneg %p122
        $region50: #{tpu_custom_call.1} parent=47 // pred_check_branch
          %327 = sbr.rel (%p325) target = $region52
        $region51: #{tpu_custom_call.1} parent=47 // pred_region
          %s328 = sand.u32 %s107, 1
          %s329 = scalar_lea.sflag [#allocation4], %s328
          %s330 = sand.u32 %s107, 1
          %s331 = smul.addr %s330, 16
          %s332 = scalar_lea.vmem [#allocation7], %s331
          %334 = dma.done %s329, 256
        $region52: #{tpu_custom_call.1} parent=47 // pred_fallthru
          _
      $region48: #{tpu_custom_call.1} parent=5 // pred_fallthru
        _
    $region6: #{tpu_custom_call.1} parent=1 // loop_footer
      %s21 = sadd.s32 1, %s17
    $region7: #{tpu_custom_call.1} parent=1 // loop_footer_branch
      %16 = sbr.rel target = $region3
    $region8: #{tpu_custom_call.1} parent=1 // loop_exit
      _
    %335 = vsyncpa [#allocation3], 1
    %s336 = scalar_lea.sflag [#allocation3], 1
    %337 = vsyncpa %s336, 1
    %338 = vsyncpa [#allocation6], 1
    %s339 = scalar_lea.sflag [#allocation6], 1
    %340 = vsyncpa %s339, 1
    %341 = vsyncpa [#allocation4], 1
    %s342 = scalar_lea.sflag [#allocation4], 1
    %343 = vsyncpa %s342, 1

</llo_original>
